<compile_context>
chip_gen: v7x
topology: tpu7x:2x2x1
jax: 0.10.0
libtpu: 0.0.40
codegen_flags: <defaults>
</compile_context>

<pallas_src>
import jax
import jax.numpy as jnp
from jax.experimental import pallas as pl
from jax.experimental.pallas import tpu as pltpu


def _light_embed_kernel(x_ref, mul_ref, add_ref, o_ref):
    # x_ref / o_ref: (TM, H*W) tile in VMEM.
    # mul_ref / add_ref: (TM, 1) f32 per-row scale/shift, broadcast along lanes.
    x = x_ref[...].astype(jnp.float32)
    y = x * mul_ref[...] + add_ref[...]
    o_ref[...] = y.astype(o_ref.dtype)


def _choose_tm(rows, row_bytes):
    """Pick a row-tile size: multiple of 8, ~2 MiB per tile, <=4 MiB."""
    target_bytes = 2 << 20   # ~2 MiB: >=85% of HBM roofline on v6e measurements
    cap_bytes = 4 << 20      # keep 2x(in)+2x(out) tiles well under v7x scoped VMEM
    tm = max(8, min(target_bytes, cap_bytes) // max(row_bytes, 1))
    tm = (int(tm) // 8) * 8
    tm = max(8, tm)
    # Never exceed the (8-rounded-up) number of rows.
    rows_padded = ((rows + 7) // 8) * 8
    return min(tm, rows_padded)


def light_embed_block(x, light_mul, light_add, light_direction=0):
    """Pallas implementation of LightEmbedBlock.forward.

    Args:
      x:               (N, C, H, W) float array (NCHW, like the PyTorch module).
      light_mul:       (2, C) parameter.
      light_add:       (2, C) parameter.
      light_direction: 0 or 1 (static Python int, like the module attribute).
    Returns:
      (N, C, H, W) array, same dtype as x.
    """
    N, C, H, W = x.shape
    rows = N * C
    cols = H * W

    # Direction selection + per-row parameter expansion: cheap glue -> plain JAX.
    mul_d = light_mul[light_direction].astype(jnp.float32)   # (C,)
    add_d = light_add[light_direction].astype(jnp.float32)   # (C,)
    mul2 = jnp.tile(mul_d, N)[:, None]                        # (N*C, 1)
    add2 = jnp.tile(add_d, N)[:, None]                        # (N*C, 1)

    # Lane-dense 2-D view of the data.
    x2 = x.reshape(rows, cols)

    row_bytes = cols * jnp.dtype(x.dtype).itemsize
    tm = _choose_tm(rows, row_bytes)
    grid = (pl.cdiv(rows, tm),)

    out2 = pl.pallas_call(
        _light_embed_kernel,
        out_shape=jax.ShapeDtypeStruct((rows, cols), x.dtype),
        grid=grid,
        in_specs=[
            pl.BlockSpec((tm, cols), lambda i: (i, 0)),   # x tile (full-width lanes)
            pl.BlockSpec((tm, 1), lambda i: (i, 0)),      # per-row scale
            pl.BlockSpec((tm, 1), lambda i: (i, 0)),      # per-row shift
        ],
        out_specs=pl.BlockSpec((tm, cols), lambda i: (i, 0)),
        compiler_params=pltpu.CompilerParams(
            dimension_semantics=("parallel",)
        ),
    )(x2, mul2, add2)

    return out2.reshape(N, C, H, W)


if __name__ == "__main__":
    key = jax.random.PRNGKey(0)
    k_x, k_mul, k_add = jax.random.split(key, 3)

    N, C, H, W = 2, 4, 16, 16
    x = jax.random.normal(k_x, (N, C, H, W), dtype=jnp.float32)

    # Parameter shapes from __init__: light_mul (2, C), light_add (2, C).
    # (PyTorch init gives ones / ~zeros; use deterministic random values here so
    #  the per-channel affine is actually exercised.)
    light_mul = 1.0 + 0.1 * jax.random.normal(k_mul, (2, C), dtype=jnp.float32)
    light_add = 0.001 * jax.random.normal(k_add, (2, C), dtype=jnp.float32)

    direction = 0  # corresponds to set_light_direction(0), the default

    out = light_embed_block(x, light_mul, light_add, direction)
    out = jax.block_until_ready(out)

    # Reference (pure JAX) check of the forward semantics.
    ref = x * light_mul[direction][None, :, None, None] \
            + light_add[direction][None, :, None, None]
    assert out.shape == ref.shape and out.dtype == ref.dtype
    assert jnp.allclose(out, ref, atol=1e-6, rtol=1e-6)

    print("KERNEL_OK")
</pallas_src>

<mosaic_0001>
module attributes {stable_mosaic.version = 11 : i64} {
  func.func @_light_embed_kernel(%arg0: i32, %arg1: memref<8x256xf32, #tpu.memory_space<vmem>>, %arg2: memref<8x1xf32, #tpu.memory_space<vmem>>, %arg3: memref<8x1xf32, #tpu.memory_space<vmem>>, %arg4: memref<8x256xf32, #tpu.memory_space<vmem>>) attributes {dimension_semantics = [#tpu.dimension_semantics<parallel>], iteration_bounds = array<i64: 1>, scalar_prefetch = 0 : i64, scratch_operands = 0 : i64, tpu.core_type = #tpu.core_type<tc>, window_params = [{transform_indices = @transform_0, window_bounds = array<i64: 8, 256>}, {transform_indices = @transform_1, window_bounds = array<i64: 8, 1>}, {transform_indices = @transform_2, window_bounds = array<i64: 8, 1>}, {transform_indices = @transform_3, window_bounds = array<i64: 8, 256>}]} {
    %c0 = arith.constant 0 : index
    %c0_0 = arith.constant 0 : index
    %0 = vector.load %arg1[%c0, %c0_0] : memref<8x256xf32, #tpu.memory_space<vmem>>, vector<8x256xf32>
    %c0_1 = arith.constant 0 : index
    %c0_2 = arith.constant 0 : index
    %1 = vector.load %arg2[%c0_1, %c0_2] : memref<8x1xf32, #tpu.memory_space<vmem>>, vector<8x1xf32>
    %2 = vector.broadcast %1 : vector<8x1xf32> to vector<8x256xf32>
    %3 = arith.mulf %0, %2 : vector<8x256xf32>
    %c0_3 = arith.constant 0 : index
    %c0_4 = arith.constant 0 : index
    %4 = vector.load %arg3[%c0_3, %c0_4] : memref<8x1xf32, #tpu.memory_space<vmem>>, vector<8x1xf32>
    %5 = vector.broadcast %4 : vector<8x1xf32> to vector<8x256xf32>
    %6 = arith.addf %3, %5 : vector<8x256xf32>
    %c0_5 = arith.constant 0 : index
    %c0_6 = arith.constant 0 : index
    %7 = vector.load %arg4[%c0_5, %c0_6] : memref<8x256xf32, #tpu.memory_space<vmem>>, vector<8x256xf32>
    tpu.vector_store %arg4[%c0_5, %c0_6], %6 {strides = array<i32>} : memref<8x256xf32, #tpu.memory_space<vmem>>, vector<8x256xf32>,
    return
  }
  func.func @transform_0(%arg0: i32) -> (i32, i32) {
    %c0_i32 = arith.constant 0 : i32
    %c0_i32_0 = arith.constant 0 : i32
    return %arg0, %c0_i32 : i32, i32
  }
  func.func @transform_1(%arg0: i32) -> (i32, i32) {
    %c0_i32 = arith.constant 0 : i32
    %c0_i32_0 = arith.constant 0 : i32
    return %arg0, %c0_i32 : i32, i32
  }
  func.func @transform_2(%arg0: i32) -> (i32, i32) {
    %c0_i32 = arith.constant 0 : i32
    %c0_i32_0 = arith.constant 0 : i32
    return %arg0, %c0_i32 : i32, i32
  }
  func.func @transform_3(%arg0: i32) -> (i32, i32) {
    %c0_i32 = arith.constant 0 : i32
    %c0_i32_0 = arith.constant 0 : i32
    return %arg0, %c0_i32 : i32, i32
  }
}

</mosaic_0001>

<llo_original>
// kernel: tpu_custom_call.1
$region0: #{tpu_custom_call.1}
  #allocation0 [shape = 'u32[]', space=smem, size = 0x4, offset = 0x4, fixed_abs, tag = 'smem constant byte address 0x4 - core index']
  #allocation1 [shape = 'u32[144,128]{1,0:T(1,128)}', space=vmem, size = 0x12000, scoped, tag = 'internal scratch']
  %s0 = inlined_call_operand.vmem [shape: f32[8,256], index: 0, kind: input, shape index: {}]
  %s1 = inlined_call_operand.vmem [shape: f32[8,1], index: 1, kind: input, shape index: {}]
  %s2 = inlined_call_operand.vmem [shape: f32[8,1], index: 2, kind: input, shape index: {}]
  %s3 = inlined_call_operand.hbm [shape: f32[8,256], index: 3, kind: output, shape index: {}]
  %s4 = sld [smem:[#allocation0]]
  $region22: #{tpu_custom_call.1} parent=0
    _
  %s6 = ssub.s32 1, %s4
  %s7 = scalar_select 0, %s6, %s4
  $region1: #{tpu_custom_call.1} parent=0
    #allocation2 [shape = 'u8[8192]{0}', space=vmem, size = 0x2000, scoped, tag = 'output window, operand 0, single buffered']
    #allocation3 [shape = 's32[1]{0}', space=sflag, size = 0x4, scoped, tag = 'scoped memory for tpu_custom_call.1']
    %8 = vsyncpa [#allocation3], 0
    // Predicated region
    $region2: #{tpu_custom_call.1} parent=1 // pred_check
      _
    $region3: #{tpu_custom_call.1} parent=1 // pred_check_branch
      %10 = sbr.rel (0) target = $region5
    $region4: #{tpu_custom_call.1} parent=1 // pred_region
      _
    $region5: #{tpu_custom_call.1} parent=1 // pred_fallthru
      _
    // Predicated region
    $region6: #{tpu_custom_call.1} parent=1 // pred_check
      _
    $region7: #{tpu_custom_call.1} parent=1 // pred_check_branch
      %12 = sbr.rel (0) target = $region9
    $region8: #{tpu_custom_call.1} parent=1 // pred_region
      _
    $region9: #{tpu_custom_call.1} parent=1 // pred_fallthru
      _
    // Predicated region
    $region10: #{tpu_custom_call.1} parent=1 // pred_check
      _
    $region11: #{tpu_custom_call.1} parent=1 // pred_check_branch
      %14 = sbr.rel (0) target = $region13
    $region12: #{tpu_custom_call.1} parent=1 // pred_region
      _
    $region13: #{tpu_custom_call.1} parent=1 // pred_fallthru
      _
    %v15 = vld [vmem:[%s0] sm:$0xff]
    %v16 = vld [vmem:[%s0 + $0x8] sm:$0xff]
    %v17 = vld [vmem:[%s1] sm:$0xff]
    %19 = vset.pattern.permute.xlu0 0
    %20 = vperm.xlu0 %19, %v17
    %v21 = vpop.permute.xlu0 %20
    %v23 = vmul.f32 %v15, %v21
    %v24 = vmul.f32 %v16, %v21
    %v25 = vld [vmem:[%s2] sm:$0xff]
    %27 = vset.pattern.permute.xlu0 0
    %28 = vperm.xlu0 %27, %v25
    %v29 = vpop.permute.xlu0 %28
    %v31 = vadd.f32 %v23, %v29
    %v32 = vadd.f32 %v24, %v29
    %33 = vst [vmem:[#allocation2] sm:$0xff] %v31
    %34 = vst [vmem:[#allocation2 + $0x8] sm:$0xff] %v32
    // Predicated region
    $region14: #{tpu_custom_call.1} parent=1 // pred_check
      _
    $region15: #{tpu_custom_call.1} parent=1 // pred_check_branch
      %36 = sbr.rel (0) target = $region17
    $region16: #{tpu_custom_call.1} parent=1 // pred_region
      %s38 = ssub.s32 256, 256
      %39 = vsyncadd [#allocation3], %s38
      %s41 = sshll.u32 [#allocation2], 4
      %s42 = int_to_ptr.vmem [resolvable:$true] %s41
      %44 = dma.vmem_to_hbm [thread:$0]  %s42, 256, %s3, [#allocation3]
    $region17: #{tpu_custom_call.1} parent=1 // pred_fallthru
      _
    // Predicated region
    $region18: #{tpu_custom_call.1} parent=1 // pred_check
      _
    $region19: #{tpu_custom_call.1} parent=1 // pred_check_branch
      %46 = sbr.rel (0) target = $region21
    $region20: #{tpu_custom_call.1} parent=1 // pred_region
      %47 = dma.done [#allocation3], 256
    $region21: #{tpu_custom_call.1} parent=1 // pred_fallthru
      _
    %48 = vsyncpa [#allocation3], 1

</llo_original>
